<compile_context>
chip_gen: v7x
topology: tpu7x:2x2x1
jax: 0.10.0
libtpu: 0.0.40
codegen_flags: <defaults>
</compile_context>

<pallas_src>
import math
import time

import jax
import jax.numpy as jnp
from jax.experimental import pallas as pl
from jax.experimental.pallas import tpu as pltpu  # noqa: F401  (TPU backend)

# ---- small, deterministic model config (stand-in for chatglm2-6b) ----------
S = 8              # sequence length
H = 32             # hidden size
NH = 2             # attention (query) heads
DH = H // NH       # head dim (16)
NKV = 1            # multi-query attention: 1 KV head (ChatGLM2 style)
FFN = 64           # MLP inner dim
VOCAB = 128        # vocabulary size (lane-dense logits store)
EPS = 1e-5
QW = NH * DH       # fused query width  (32)
KW = NKV * DH      # fused kv width     (16)

# packed-weight lane offsets (all multiples of 128 -> tile-aligned slices)
W_GU_OFF = 0
W_LMH_OFF = 2 * FFN            # 128
W_QKV_OFF = 2 * FFN + VOCAB    # 256
W_IN_COLS = W_QKV_OFF + QW + 2 * KW   # 320

# packed misc (f32) layout: rows 0..2 = ln1/ln2/lnf, rows 8..15 = cos|sin
MISC_ROWS = 16
TRIG_ROW = MISC_ROWS - S       # 8 (sublane-tile aligned)


def _full_spec(shape):
    # whole-array block (no grid); everything here fits VMEM trivially.
    return pl.BlockSpec(shape, lambda *_: (0,) * len(shape))


def _rmsnorm(v, w):
    var = jnp.mean(v * v, axis=-1, keepdims=True)
    return v * jax.lax.rsqrt(var + EPS) * w


def _rope(xh, cos, sin):
    # NeoX-style rotate-half, exact lane work in f32 (no MXU matmul, no roll):
    # rotate_half(x) = concat([-x2, x1]).
    # TODO(synk): ChatGLM2 applies rotary to only half of each head's dims
    # with interleaved pairing; this full-dim form is a stand-in.
    half = xh.shape[-1] // 2
    rot = jnp.concatenate([-xh[:, half:], xh[:, :half]], axis=-1)
    return xh * cos + rot * sin


# ----------------------------- fused kernel ---------------------------------
def chat_fused_kernel(ids_ref, embed_ref, w_in_ref, w_out_ref, misc_ref, o_ref):
    """Embedding gather + GLM block + final norm + LM head, fully fused."""
    # ---- in-kernel embedding gather: exact one-hot bf16 matmul -------------
    ids = ids_ref[...]                                              # (S, 1) i32
    vocab_iota = jax.lax.broadcasted_iota(jnp.int32, (S, VOCAB), 1)
    onehot = jnp.where(vocab_iota == ids, 1.0, 0.0).astype(jnp.bfloat16)
    x = jnp.dot(onehot, embed_ref[...],
                preferred_element_type=jnp.float32)                 # (S, H) f32

    # ---- packed small params ------------------------------------------------
    ln1 = misc_ref[0:1, :]                                          # (1, H)
    ln2 = misc_ref[1:2, :]
    lnf = misc_ref[2:3, :]
    cos = misc_ref[TRIG_ROW:TRIG_ROW + S, 0:DH]                     # (S, DH)
    sin = misc_ref[TRIG_ROW:TRIG_ROW + S, DH:2 * DH]                # (S, DH)

    # ---- attention: RMSNorm -> fused QKV -> RoPE -> MQA -> wo + residual ----
    h = _rmsnorm(x, ln1).astype(jnp.bfloat16)
    qkv = jnp.dot(h, w_in_ref[:, W_QKV_OFF:W_QKV_OFF + QW + 2 * KW],
                  preferred_element_type=jnp.float32)               # (S, 64)
    q = qkv[:, :QW]                                                 # (S, QW)
    k = qkv[:, QW:QW + KW]                                          # (S, KW) single KV head
    v = qkv[:, QW + KW:QW + 2 * KW]                                 # (S, KW)

    k = _rope(k, cos, sin)                                          # f32 RoPE
    kt_bf = k.T.astype(jnp.bfloat16)                                # (DH, S) shared by heads
    v_bf = v.astype(jnp.bfloat16)

    rows = jax.lax.broadcasted_iota(jnp.int32, (S, S), 0)
    cols = jax.lax.broadcasted_iota(jnp.int32, (S, S), 1)
    causal = cols <= rows
    scale = 1.0 / math.sqrt(DH)

    # MQA head loop (NH=2, static unroll).  wo is folded per-head so there is
    # no head concatenate; the two heads' dots are independent and overlap in
    # the scheduled bundle stream.
    for hd in range(NH):
        qh = _rope(q[:, hd * DH:(hd + 1) * DH], cos, sin) * scale   # f32
        s = jnp.dot(qh.astype(jnp.bfloat16), kt_bf,
                    preferred_element_type=jnp.float32)             # (S, S)
        s = jnp.where(causal, s, -1e30)
        p = jnp.exp(s - jnp.max(s, axis=-1, keepdims=True))
        denom = jnp.sum(p, axis=-1, keepdims=True)
        pv = jnp.dot(p.astype(jnp.bfloat16), v_bf,
                     preferred_element_type=jnp.float32) / denom    # exact norm
        wo_h = w_out_ref[hd * DH:(hd + 1) * DH, :]                  # (DH, H) bf16
        x = x + jnp.dot(pv.astype(jnp.bfloat16), wo_h,
                        preferred_element_type=jnp.float32)         # fused residual

    # ---- MLP: RMSNorm -> fused gate|up -> SwiGLU -> wd + residual -----------
    h2 = _rmsnorm(x, ln2).astype(jnp.bfloat16)
    gu = jnp.dot(h2, w_in_ref[:, W_GU_OFF:W_GU_OFF + 2 * FFN],
                 preferred_element_type=jnp.float32)                # (S, 2*FFN)
    g = gu[:, :FFN]
    u = gu[:, FFN:]
    m = (g * jax.nn.sigmoid(g) * u).astype(jnp.bfloat16)            # SiLU(g) * u
    x = x + jnp.dot(m, w_out_ref[QW:QW + FFN, :],
                    preferred_element_type=jnp.float32)             # fused residual

    # ---- final norm + LM head ------------------------------------------------
    xf = _rmsnorm(x, lnf).astype(jnp.bfloat16)
    o_ref[...] = jnp.dot(xf, w_in_ref[:, W_LMH_OFF:W_LMH_OFF + VOCAB],
                         preferred_element_type=jnp.float32).astype(o_ref.dtype)


# ----------------------------- wrapper ---------------------------------------
@jax.jit
def glm_forward(params, token_ids):
    ids2d = token_ids.reshape(S, 1).astype(jnp.int32)
    return pl.pallas_call(
        chat_fused_kernel,
        out_shape=jax.ShapeDtypeStruct((S, VOCAB), jnp.float32),
        in_specs=[
            _full_spec((S, 1)),                 # token ids
            _full_spec((VOCAB, H)),             # embedding table (bf16)
            _full_spec((H, W_IN_COLS)),         # packed wgu | lm_head | wqkv (bf16)
            _full_spec((QW + FFN, H)),          # packed wo | wd (bf16)
            _full_spec((MISC_ROWS, H)),         # packed ln1/ln2/lnf + cos|sin (f32)
        ],
        out_specs=_full_spec((S, VOCAB)),
    )(ids2d, params["embed"], params["w_in"], params["w_out"], params["misc"])


# ----------------------------- params -----------------------------------------
def init_params(key):
    ks = jax.random.split(key, 6)

    def w(k, shape, scale=0.05):
        # bf16 weights for single-pass MXU; accumulation stays f32 in-kernel.
        return (jax.random.normal(k, shape, jnp.float32) * scale).astype(jnp.bfloat16)

    # RoPE tables (constants), packed with the RMSNorm weights.
    pos = jnp.arange(S, dtype=jnp.float32)[:, None]
    half = DH // 2
    inv_freq = 1.0 / (10000.0 ** (jnp.arange(half, dtype=jnp.float32) / half))
    ang = pos * inv_freq[None, :]                        # (S, half)
    ang = jnp.concatenate([ang, ang], axis=-1)           # (S, DH)
    trig = jnp.concatenate([jnp.cos(ang), jnp.sin(ang)], axis=1)     # (S, 2*DH)=(8,32)

    ln_rows = jnp.ones((3, H), jnp.float32)              # ln1 / ln2 / lnf weights
    pad = jnp.zeros((MISC_ROWS - 3 - S, H), jnp.float32)
    misc = jnp.concatenate([ln_rows, pad, trig], axis=0)              # (16, 32)

    wqkv = w(ks[1], (H, QW + 2 * KW))                    # fused Q|K|V projection
    wgu = w(ks[3], (H, 2 * FFN))                         # fused gate|up projection
    lm_head = w(ks[5], (H, VOCAB))
    # lane-128-aligned packing: [wgu (128) | lm_head (128) | wqkv (64)]
    w_in = jnp.concatenate([wgu, lm_head, wqkv], axis=1)             # (32, 320)

    wo = w(ks[2], (QW, H))
    wd = w(ks[4], (FFN, H))
    w_out = jnp.concatenate([wo, wd], axis=0)                         # (96, 32)

    embed = (jax.random.normal(ks[0], (VOCAB, H), jnp.float32) * 0.02
             ).astype(jnp.bfloat16)

    return dict(embed=embed, w_in=w_in, w_out=w_out, misc=misc)


if __name__ == "__main__":
    key = jax.random.PRNGKey(0)
    pkey, tkey = jax.random.split(key)
    params = init_params(pkey)
    token_ids = jax.random.randint(tkey, (S,), 0, VOCAB)

    # Warmup (trace + compile) — excluded from timing.
    logits = jax.block_until_ready(glm_forward(params, token_ids))

    # infer_time: min over N runs of the compiled forward (mirrors the original
    # module's timing intent without counting compilation).  Note: this is
    # host wall-clock incl. dispatch; use xprof for on-device kernel time.
    n_iters = 20
    times = []
    for _ in range(n_iters):
        t0 = time.perf_counter()
        jax.block_until_ready(glm_forward(params, token_ids))
        times.append(time.perf_counter() - t0)
    infer_time = round(min(times), 6)
    infer_time_mean = round(sum(times) / len(times), 6)

    # "response" stand-in: greedy next-token id at the last position.
    response_id = int(jnp.argmax(logits[-1]))

    assert logits.shape == (S, VOCAB)
    assert bool(jnp.all(jnp.isfinite(logits)))
    assert 0 <= response_id < VOCAB
    assert infer_time >= 0.0 and infer_time_mean >= infer_time
    print("KERNEL_OK")
</pallas_src>

<mosaic_0001>
module attributes {stable_mosaic.version = 11 : i64} {
  func.func @chat_fused_kernel(%arg0: memref<8x1xi32, #tpu.memory_space<vmem>>, %arg1: memref<128x32xbf16, #tpu.memory_space<vmem>>, %arg2: memref<32x320xbf16, #tpu.memory_space<vmem>>, %arg3: memref<96x32xbf16, #tpu.memory_space<vmem>>, %arg4: memref<16x32xf32, #tpu.memory_space<vmem>>, %arg5: memref<8x128xf32, #tpu.memory_space<vmem>>) attributes {dimension_semantics = [], scalar_prefetch = 0 : i64, scratch_operands = 0 : i64, tpu.core_type = #tpu.core_type<tc>} {
    %c0 = arith.constant 0 : index
    %c0_0 = arith.constant 0 : index
    %0 = vector.load %arg0[%c0, %c0_0] : memref<8x1xi32, #tpu.memory_space<vmem>>, vector<8x1xi32>
    %1 = tpu.iota {dimensions = array<i32: 1>} : vector<8x128xi32>
    %2 = vector.broadcast %0 : vector<8x1xi32> to vector<8x128xi32>
    %3 = arith.cmpi eq, %1, %2 : vector<8x128xi32>
    %cst = arith.constant 1.000000e+00 : f32
    %cst_1 = arith.constant 0.000000e+00 : f32
    %4 = vector.broadcast %cst : f32 to vector<8x128xf32>
    %5 = vector.broadcast %cst_1 : f32 to vector<8x128xf32>
    %6 = arith.select %3, %4, %5 : vector<8x128xi1>, vector<8x128xf32>
    %7 = arith.truncf %6 : vector<8x128xf32> to vector<8x128xbf16>
    %c0_2 = arith.constant 0 : index
    %c0_3 = arith.constant 0 : index
    %8 = vector.load %arg1[%c0_2, %c0_3] : memref<128x32xbf16, #tpu.memory_space<vmem>>, vector<128x32xbf16>
    %cst_4 = arith.constant dense<0.000000e+00> : vector<8x32xf32>
    %9 = tpu.matmul %7, %8, %cst_4 {dimension_numbers = #tpu.dot_dimension_numbers<[1], [0], [0], [1], [0, 0, 1, 1], [], []>} : vector<8x128xbf16>, vector<128x32xbf16>, vector<8x32xf32> -> vector<8x32xf32>
    %c0_5 = arith.constant 0 : index
    %c0_6 = arith.constant 0 : index
    %10 = vector.load %arg4[%c0_5, %c0_6] : memref<16x32xf32, #tpu.memory_space<vmem>>, vector<1x32xf32>
    %c1 = arith.constant 1 : index
    %c0_7 = arith.constant 0 : index
    %11 = vector.load %arg4[%c1, %c0_7] : memref<16x32xf32, #tpu.memory_space<vmem>>, vector<1x32xf32>
    %c2 = arith.constant 2 : index
    %c0_8 = arith.constant 0 : index
    %12 = vector.load %arg4[%c2, %c0_8] : memref<16x32xf32, #tpu.memory_space<vmem>>, vector<1x32xf32>
    %c8 = arith.constant 8 : index
    %c0_9 = arith.constant 0 : index
    %13 = vector.load %arg4[%c8, %c0_9] : memref<16x32xf32, #tpu.memory_space<vmem>>, vector<8x16xf32>
    %c8_10 = arith.constant 8 : index
    %c16 = arith.constant 16 : index
    %14 = vector.load %arg4[%c8_10, %c16] : memref<16x32xf32, #tpu.memory_space<vmem>>, vector<8x16xf32>
    %15 = arith.mulf %9, %9 : vector<8x32xf32>
    %cst_11 = arith.constant dense<0.000000e+00> : vector<8xf32>
    %16 = vector.multi_reduction <add>, %15, %cst_11 [1] : vector<8x32xf32> to vector<8xf32>
    %17 = vector.shape_cast %16 : vector<8xf32> to vector<8x1xf32>
    %cst_12 = arith.constant 3.200000e+01 : f32
    %18 = vector.broadcast %cst_12 : f32 to vector<8x1xf32>
    %19 = arith.divf %17, %18 : vector<8x1xf32>
    %cst_13 = arith.constant 9.99999974E-6 : f32
    %20 = vector.broadcast %cst_13 : f32 to vector<8x1xf32>
    %21 = arith.addf %19, %20 : vector<8x1xf32>
    %22 = math.rsqrt %21 : vector<8x1xf32>
    %23 = vector.broadcast %22 : vector<8x1xf32> to vector<8x32xf32>
    %24 = arith.mulf %9, %23 : vector<8x32xf32>
    %25 = vector.broadcast %10 : vector<1x32xf32> to vector<8x32xf32>
    %26 = arith.mulf %24, %25 : vector<8x32xf32>
    %27 = arith.truncf %26 : vector<8x32xf32> to vector<8x32xbf16>
    %c0_14 = arith.constant 0 : index
    %c256 = arith.constant 256 : index
    %28 = vector.load %arg2[%c0_14, %c256] : memref<32x320xbf16, #tpu.memory_space<vmem>>, vector<32x64xbf16>
    %cst_15 = arith.constant dense<0.000000e+00> : vector<8x64xf32>
    %29 = tpu.matmul %27, %28, %cst_15 {dimension_numbers = #tpu.dot_dimension_numbers<[1], [0], [0], [1], [0, 0, 1, 1], [], []>} : vector<8x32xbf16>, vector<32x64xbf16>, vector<8x64xf32> -> vector<8x64xf32>
    %30 = vector.extract_strided_slice %29 {offsets = [0, 0], sizes = [8, 32], strides = [1, 1]} : vector<8x64xf32> to vector<8x32xf32>
    %31 = vector.extract_strided_slice %29 {offsets = [0, 32], sizes = [8, 16], strides = [1, 1]} : vector<8x64xf32> to vector<8x16xf32>
    %32 = vector.extract_strided_slice %29 {offsets = [0, 48], sizes = [8, 16], strides = [1, 1]} : vector<8x64xf32> to vector<8x16xf32>
    %33 = vector.extract_strided_slice %31 {offsets = [0, 8], sizes = [8, 8], strides = [1, 1]} : vector<8x16xf32> to vector<8x8xf32>
    %cst_16 = arith.constant 0.000000e+00 : f32
    %34 = vector.broadcast %cst_16 : f32 to vector<8x8xf32>
    %35 = arith.subf %34, %33 : vector<8x8xf32>
    %36 = vector.extract_strided_slice %31 {offsets = [0, 0], sizes = [8, 8], strides = [1, 1]} : vector<8x16xf32> to vector<8x8xf32>
    %37 = tpu.concatenate %35, %36 in 1 : vector<8x8xf32>, vector<8x8xf32> -> vector<8x16xf32>
    %38 = arith.mulf %31, %13 : vector<8x16xf32>
    %39 = arith.mulf %37, %14 : vector<8x16xf32>
    %40 = arith.addf %38, %39 : vector<8x16xf32>
    %41 = tpu.transpose %40, [1, 0] : vector<8x16xf32> -> vector<16x8xf32>
    %42 = arith.truncf %41 : vector<16x8xf32> to vector<16x8xbf16>
    %43 = arith.truncf %32 : vector<8x16xf32> to vector<8x16xbf16>
    %44 = tpu.iota {dimensions = array<i32: 0>} : vector<8x8xi32>
    %45 = tpu.iota {dimensions = array<i32: 1>} : vector<8x8xi32>
    %46 = arith.cmpi sle, %45, %44 : vector<8x8xi32>
    %47 = vector.extract_strided_slice %30 {offsets = [0, 0], sizes = [8, 16], strides = [1, 1]} : vector<8x32xf32> to vector<8x16xf32>
    %48 = vector.extract_strided_slice %47 {offsets = [0, 8], sizes = [8, 8], strides = [1, 1]} : vector<8x16xf32> to vector<8x8xf32>
    %cst_17 = arith.constant 0.000000e+00 : f32
    %49 = vector.broadcast %cst_17 : f32 to vector<8x8xf32>
    %50 = arith.subf %49, %48 : vector<8x8xf32>
    %51 = vector.extract_strided_slice %47 {offsets = [0, 0], sizes = [8, 8], strides = [1, 1]} : vector<8x16xf32> to vector<8x8xf32>
    %52 = tpu.concatenate %50, %51 in 1 : vector<8x8xf32>, vector<8x8xf32> -> vector<8x16xf32>
    %53 = arith.mulf %47, %13 : vector<8x16xf32>
    %54 = arith.mulf %52, %14 : vector<8x16xf32>
    %55 = arith.addf %53, %54 : vector<8x16xf32>
    %cst_18 = arith.constant 2.500000e-01 : f32
    %56 = vector.broadcast %cst_18 : f32 to vector<8x16xf32>
    %57 = arith.mulf %55, %56 : vector<8x16xf32>
    %58 = arith.truncf %57 : vector<8x16xf32> to vector<8x16xbf16>
    %cst_19 = arith.constant dense<0.000000e+00> : vector<8x8xf32>
    %59 = tpu.matmul %58, %42, %cst_19 {dimension_numbers = #tpu.dot_dimension_numbers<[1], [0], [0], [1], [0, 0, 1, 1], [], []>} : vector<8x16xbf16>, vector<16x8xbf16>, vector<8x8xf32> -> vector<8x8xf32>
    %cst_20 = arith.constant -1.000000e+30 : f32
    %60 = vector.broadcast %cst_20 : f32 to vector<8x8xf32>
    %61 = arith.select %46, %59, %60 : vector<8x8xi1>, vector<8x8xf32>
    %cst_21 = arith.constant dense<0xFF800000> : vector<8xf32>
    %62 = vector.multi_reduction <maximumf>, %61, %cst_21 [1] : vector<8x8xf32> to vector<8xf32>
    %63 = vector.shape_cast %62 : vector<8xf32> to vector<8x1xf32>
    %64 = vector.broadcast %63 : vector<8x1xf32> to vector<8x8xf32>
    %65 = arith.subf %61, %64 : vector<8x8xf32>
    %66 = math.exp %65 : vector<8x8xf32>
    %cst_22 = arith.constant dense<0.000000e+00> : vector<8xf32>
    %67 = vector.multi_reduction <add>, %66, %cst_22 [1] : vector<8x8xf32> to vector<8xf32>
    %68 = vector.shape_cast %67 : vector<8xf32> to vector<8x1xf32>
    %69 = arith.truncf %66 : vector<8x8xf32> to vector<8x8xbf16>
    %cst_23 = arith.constant dense<0.000000e+00> : vector<8x16xf32>
    %70 = tpu.matmul %69, %43, %cst_23 {dimension_numbers = #tpu.dot_dimension_numbers<[1], [0], [0], [1], [0, 0, 1, 1], [], []>} : vector<8x8xbf16>, vector<8x16xbf16>, vector<8x16xf32> -> vector<8x16xf32>
    %71 = vector.broadcast %68 : vector<8x1xf32> to vector<8x16xf32>
    %72 = arith.divf %70, %71 : vector<8x16xf32>
    %c0_24 = arith.constant 0 : index
    %c0_25 = arith.constant 0 : index
    %73 = vector.load %arg3[%c0_24, %c0_25] : memref<96x32xbf16, #tpu.memory_space<vmem>>, vector<16x32xbf16>
    %74 = arith.truncf %72 : vector<8x16xf32> to vector<8x16xbf16>
    %cst_26 = arith.constant dense<0.000000e+00> : vector<8x32xf32>
    %75 = tpu.matmul %74, %73, %cst_26 {dimension_numbers = #tpu.dot_dimension_numbers<[1], [0], [0], [1], [0, 0, 1, 1], [], []>} : vector<8x16xbf16>, vector<16x32xbf16>, vector<8x32xf32> -> vector<8x32xf32>
    %76 = arith.addf %9, %75 : vector<8x32xf32>
    %77 = vector.extract_strided_slice %30 {offsets = [0, 16], sizes = [8, 16], strides = [1, 1]} : vector<8x32xf32> to vector<8x16xf32>
    %78 = vector.extract_strided_slice %77 {offsets = [0, 8], sizes = [8, 8], strides = [1, 1]} : vector<8x16xf32> to vector<8x8xf32>
    %cst_27 = arith.constant 0.000000e+00 : f32
    %79 = vector.broadcast %cst_27 : f32 to vector<8x8xf32>
    %80 = arith.subf %79, %78 : vector<8x8xf32>
    %81 = vector.extract_strided_slice %77 {offsets = [0, 0], sizes = [8, 8], strides = [1, 1]} : vector<8x16xf32> to vector<8x8xf32>
    %82 = tpu.concatenate %80, %81 in 1 : vector<8x8xf32>, vector<8x8xf32> -> vector<8x16xf32>
    %83 = arith.mulf %77, %13 : vector<8x16xf32>
    %84 = arith.mulf %82, %14 : vector<8x16xf32>
    %85 = arith.addf %83, %84 : vector<8x16xf32>
    %cst_28 = arith.constant 2.500000e-01 : f32
    %86 = vector.broadcast %cst_28 : f32 to vector<8x16xf32>
    %87 = arith.mulf %85, %86 : vector<8x16xf32>
    %88 = arith.truncf %87 : vector<8x16xf32> to vector<8x16xbf16>
    %cst_29 = arith.constant dense<0.000000e+00> : vector<8x8xf32>
    %89 = tpu.matmul %88, %42, %cst_29 {dimension_numbers = #tpu.dot_dimension_numbers<[1], [0], [0], [1], [0, 0, 1, 1], [], []>} : vector<8x16xbf16>, vector<16x8xbf16>, vector<8x8xf32> -> vector<8x8xf32>
    %cst_30 = arith.constant -1.000000e+30 : f32
    %90 = vector.broadcast %cst_30 : f32 to vector<8x8xf32>
    %91 = arith.select %46, %89, %90 : vector<8x8xi1>, vector<8x8xf32>
    %cst_31 = arith.constant dense<0xFF800000> : vector<8xf32>
    %92 = vector.multi_reduction <maximumf>, %91, %cst_31 [1] : vector<8x8xf32> to vector<8xf32>
    %93 = vector.shape_cast %92 : vector<8xf32> to vector<8x1xf32>
    %94 = vector.broadcast %93 : vector<8x1xf32> to vector<8x8xf32>
    %95 = arith.subf %91, %94 : vector<8x8xf32>
    %96 = math.exp %95 : vector<8x8xf32>
    %cst_32 = arith.constant dense<0.000000e+00> : vector<8xf32>
    %97 = vector.multi_reduction <add>, %96, %cst_32 [1] : vector<8x8xf32> to vector<8xf32>
    %98 = vector.shape_cast %97 : vector<8xf32> to vector<8x1xf32>
    %99 = arith.truncf %96 : vector<8x8xf32> to vector<8x8xbf16>
    %cst_33 = arith.constant dense<0.000000e+00> : vector<8x16xf32>
    %100 = tpu.matmul %99, %43, %cst_33 {dimension_numbers = #tpu.dot_dimension_numbers<[1], [0], [0], [1], [0, 0, 1, 1], [], []>} : vector<8x8xbf16>, vector<8x16xbf16>, vector<8x16xf32> -> vector<8x16xf32>
    %101 = vector.broadcast %98 : vector<8x1xf32> to vector<8x16xf32>
    %102 = arith.divf %100, %101 : vector<8x16xf32>
    %c16_34 = arith.constant 16 : index
    %c0_35 = arith.constant 0 : index
    %103 = vector.load %arg3[%c16_34, %c0_35] : memref<96x32xbf16, #tpu.memory_space<vmem>>, vector<16x32xbf16>
    %104 = arith.truncf %102 : vector<8x16xf32> to vector<8x16xbf16>
    %cst_36 = arith.constant dense<0.000000e+00> : vector<8x32xf32>
    %105 = tpu.matmul %104, %103, %cst_36 {dimension_numbers = #tpu.dot_dimension_numbers<[1], [0], [0], [1], [0, 0, 1, 1], [], []>} : vector<8x16xbf16>, vector<16x32xbf16>, vector<8x32xf32> -> vector<8x32xf32>
    %106 = arith.addf %76, %105 : vector<8x32xf32>
    %107 = arith.mulf %106, %106 : vector<8x32xf32>
    %cst_37 = arith.constant dense<0.000000e+00> : vector<8xf32>
    %108 = vector.multi_reduction <add>, %107, %cst_37 [1] : vector<8x32xf32> to vector<8xf32>
    %109 = vector.shape_cast %108 : vector<8xf32> to vector<8x1xf32>
    %cst_38 = arith.constant 3.200000e+01 : f32
    %110 = vector.broadcast %cst_38 : f32 to vector<8x1xf32>
    %111 = arith.divf %109, %110 : vector<8x1xf32>
    %cst_39 = arith.constant 9.99999974E-6 : f32
    %112 = vector.broadcast %cst_39 : f32 to vector<8x1xf32>
    %113 = arith.addf %111, %112 : vector<8x1xf32>
    %114 = math.rsqrt %113 : vector<8x1xf32>
    %115 = vector.broadcast %114 : vector<8x1xf32> to vector<8x32xf32>
    %116 = arith.mulf %106, %115 : vector<8x32xf32>
    %117 = vector.broadcast %11 : vector<1x32xf32> to vector<8x32xf32>
    %118 = arith.mulf %116, %117 : vector<8x32xf32>
    %119 = arith.truncf %118 : vector<8x32xf32> to vector<8x32xbf16>
    %c0_40 = arith.constant 0 : index
    %c0_41 = arith.constant 0 : index
    %120 = vector.load %arg2[%c0_40, %c0_41] : memref<32x320xbf16, #tpu.memory_space<vmem>>, vector<32x128xbf16>
    %cst_42 = arith.constant dense<0.000000e+00> : vector<8x128xf32>
    %121 = tpu.matmul %119, %120, %cst_42 {dimension_numbers = #tpu.dot_dimension_numbers<[1], [0], [0], [1], [0, 0, 1, 1], [], []>} : vector<8x32xbf16>, vector<32x128xbf16>, vector<8x128xf32> -> vector<8x128xf32>
    %122 = vector.extract_strided_slice %121 {offsets = [0, 0], sizes = [8, 64], strides = [1, 1]} : vector<8x128xf32> to vector<8x64xf32>
    %123 = vector.extract_strided_slice %121 {offsets = [0, 64], sizes = [8, 64], strides = [1, 1]} : vector<8x128xf32> to vector<8x64xf32>
    %124 = arith.negf %122 : vector<8x64xf32>
    %125 = math.exp %124 : vector<8x64xf32>
    %cst_43 = arith.constant 1.000000e+00 : f32
    %126 = vector.broadcast %cst_43 : f32 to vector<8x64xf32>
    %127 = arith.addf %126, %125 : vector<8x64xf32>
    %128 = arith.divf %126, %127 : vector<8x64xf32>
    %129 = arith.mulf %122, %128 : vector<8x64xf32>
    %130 = arith.mulf %129, %123 : vector<8x64xf32>
    %131 = arith.truncf %130 : vector<8x64xf32> to vector<8x64xbf16>
    %c32 = arith.constant 32 : index
    %c0_44 = arith.constant 0 : index
    %132 = vector.load %arg3[%c32, %c0_44] : memref<96x32xbf16, #tpu.memory_space<vmem>>, vector<64x32xbf16>
    %cst_45 = arith.constant dense<0.000000e+00> : vector<8x32xf32>
    %133 = tpu.matmul %131, %132, %cst_45 {dimension_numbers = #tpu.dot_dimension_numbers<[1], [0], [0], [1], [0, 0, 1, 1], [], []>} : vector<8x64xbf16>, vector<64x32xbf16>, vector<8x32xf32> -> vector<8x32xf32>
    %134 = arith.addf %106, %133 : vector<8x32xf32>
    %135 = arith.mulf %134, %134 : vector<8x32xf32>
    %cst_46 = arith.constant dense<0.000000e+00> : vector<8xf32>
    %136 = vector.multi_reduction <add>, %135, %cst_46 [1] : vector<8x32xf32> to vector<8xf32>
    %137 = vector.shape_cast %136 : vector<8xf32> to vector<8x1xf32>
    %cst_47 = arith.constant 3.200000e+01 : f32
    %138 = vector.broadcast %cst_47 : f32 to vector<8x1xf32>
    %139 = arith.divf %137, %138 : vector<8x1xf32>
    %cst_48 = arith.constant 9.99999974E-6 : f32
    %140 = vector.broadcast %cst_48 : f32 to vector<8x1xf32>
    %141 = arith.addf %139, %140 : vector<8x1xf32>
    %142 = math.rsqrt %141 : vector<8x1xf32>
    %143 = vector.broadcast %142 : vector<8x1xf32> to vector<8x32xf32>
    %144 = arith.mulf %134, %143 : vector<8x32xf32>
    %145 = vector.broadcast %12 : vector<1x32xf32> to vector<8x32xf32>
    %146 = arith.mulf %144, %145 : vector<8x32xf32>
    %147 = arith.truncf %146 : vector<8x32xf32> to vector<8x32xbf16>
    %c0_49 = arith.constant 0 : index
    %c128 = arith.constant 128 : index
    %148 = vector.load %arg2[%c0_49, %c128] : memref<32x320xbf16, #tpu.memory_space<vmem>>, vector<32x128xbf16>
    %cst_50 = arith.constant dense<0.000000e+00> : vector<8x128xf32>
    %149 = tpu.matmul %147, %148, %cst_50 {dimension_numbers = #tpu.dot_dimension_numbers<[1], [0], [0], [1], [0, 0, 1, 1], [], []>} : vector<8x32xbf16>, vector<32x128xbf16>, vector<8x128xf32> -> vector<8x128xf32>
    %c0_51 = arith.constant 0 : index
    %c0_52 = arith.constant 0 : index
    %150 = vector.load %arg5[%c0_51, %c0_52] : memref<8x128xf32, #tpu.memory_space<vmem>>, vector<8x128xf32>
    tpu.vector_store %arg5[%c0_51, %c0_52], %149 {strides = array<i32>} : memref<8x128xf32, #tpu.memory_space<vmem>>, vector<8x128xf32>,
    return
  }
}

</mosaic_0001>

<llo_original>
// kernel: glm_forward.1
$region0: #{glm_forward.1}
  #allocation0 [shape = 'u32[]', space=smem, size = 0x4, offset = 0x4, fixed_abs, tag = 'smem constant byte address 0x4 - core index']
  #allocation1 [shape = 'u32[144,128]{1,0:T(1,128)}', space=vmem, size = 0x12000, scoped, tag = 'internal scratch']
  %s0 = inlined_call_operand.vmem [shape: s32[8,1], index: 0, kind: input, shape index: {}]
  %s1 = inlined_call_operand.vmem [shape: bf16[128,32], index: 1, kind: input, shape index: {}]
  %s2 = inlined_call_operand.vmem [shape: bf16[32,320], index: 2, kind: input, shape index: {}]
  %s3 = inlined_call_operand.vmem [shape: bf16[96,32], index: 3, kind: input, shape index: {}]
  %s4 = inlined_call_operand.vmem [shape: f32[16,32], index: 4, kind: input, shape index: {}]
  %s5 = inlined_call_operand.hbm [shape: f32[8,128], index: 5, kind: output, shape index: {}]
  %s6 = sld [smem:[#allocation0]]
  $region30: #{glm_forward.1} parent=0
    _
  %s8 = ssub.s32 1, %s6
  %s9 = scalar_select 0, %s8, %s6
  $region1: #{glm_forward.1} parent=0
    #allocation2 [shape = 'u8[4096]{0}', space=vmem, size = 0x1000, scoped, tag = 'output window, operand 0, single buffered']
    #allocation3 [shape = 's32[1]{0}', space=sflag, size = 0x4, scoped, tag = 'scoped memory for glm_forward.1']
    %10 = vsyncpa [#allocation3], 0
    // Predicated region
    $region2: #{glm_forward.1} parent=1 // pred_check
      _
    $region3: #{glm_forward.1} parent=1 // pred_check_branch
      %12 = sbr.rel (0) target = $region5
    $region4: #{glm_forward.1} parent=1 // pred_region
      _
    $region5: #{glm_forward.1} parent=1 // pred_fallthru
      _
    // Predicated region
    $region6: #{glm_forward.1} parent=1 // pred_check
      _
    $region7: #{glm_forward.1} parent=1 // pred_check_branch
      %14 = sbr.rel (0) target = $region9
    $region8: #{glm_forward.1} parent=1 // pred_region
      _
    $region9: #{glm_forward.1} parent=1 // pred_fallthru
      _
    // Predicated region
    $region10: #{glm_forward.1} parent=1 // pred_check
      _
    $region11: #{glm_forward.1} parent=1 // pred_check_branch
      %16 = sbr.rel (0) target = $region13
    $region12: #{glm_forward.1} parent=1 // pred_region
      _
    $region13: #{glm_forward.1} parent=1 // pred_fallthru
      _
    // Predicated region
    $region14: #{glm_forward.1} parent=1 // pred_check
      _
    $region15: #{glm_forward.1} parent=1 // pred_check_branch
      %18 = sbr.rel (0) target = $region17
    $region16: #{glm_forward.1} parent=1 // pred_region
      _
    $region17: #{glm_forward.1} parent=1 // pred_fallthru
      _
    // Predicated region
    $region18: #{glm_forward.1} parent=1 // pred_check
      _
    $region19: #{glm_forward.1} parent=1 // pred_check_branch
      %20 = sbr.rel (0) target = $region21
    $region20: #{glm_forward.1} parent=1 // pred_region
      _
    $region21: #{glm_forward.1} parent=1 // pred_fallthru
      _
    %v22 = vld [vmem:[%s0] sm:$0xff]
    %v23 = vlaneseq
    %v24 = vand.u32 %v23, 127
    %25 = vset.pattern.permute.xlu0 0
    %26 = vperm.xlu0 %25, %v22
    %v27 = vpop.permute.xlu0 %26
    %vm28 = vcmp.eq.s32.totalorder %v24, %v27
    %v29 = vsel %vm28, 1.0, 0.0
    %v30 = vpack.c.bf16 %v29, %v29
    %v31 = vld [vmem:[%s1] sm:$0xf]
    %v32 = vld [vmem:[%s1 + $0x4] sm:$0xf]
    %v33 = vld [vmem:[%s1 + $0x8] sm:$0xf]
    %v34 = vld [vmem:[%s1 + $0xc] sm:$0xf]
    %v35 = vld [vmem:[%s1 + $0x10] sm:$0xf]
    %v36 = vld [vmem:[%s1 + $0x14] sm:$0xf]
    %v37 = vld [vmem:[%s1 + $0x18] sm:$0xf]
    %v38 = vld [vmem:[%s1 + $0x1c] sm:$0xf]
    %v39 = vld [vmem:[%s1 + $0x20] sm:$0xf]
    %v40 = vld [vmem:[%s1 + $0x24] sm:$0xf]
    %v41 = vld [vmem:[%s1 + $0x28] sm:$0xf]
    %v42 = vld [vmem:[%s1 + $0x2c] sm:$0xf]
    %v43 = vld [vmem:[%s1 + $0x30] sm:$0xf]
    %v44 = vld [vmem:[%s1 + $0x34] sm:$0xf]
    %v45 = vld [vmem:[%s1 + $0x38] sm:$0xf]
    %v46 = vld [vmem:[%s1 + $0x3c] sm:$0xf]
    %v63 = vunpack.c.l.b16 %v31
    %v64 = vunpack.c.l.b16 %v32
    %v65 = vunpack.c.l.b16 %v33
    %v66 = vunpack.c.l.b16 %v34
    %v67 = vunpack.c.l.b16 %v35
    %v68 = vunpack.c.l.b16 %v36
    %v69 = vunpack.c.l.b16 %v37
    %v70 = vunpack.c.l.b16 %v38
    %v71 = vunpack.c.l.b16 %v39
    %v72 = vunpack.c.l.b16 %v40
    %v73 = vunpack.c.l.b16 %v41
    %v74 = vunpack.c.l.b16 %v42
    %v75 = vunpack.c.l.b16 %v43
    %v76 = vunpack.c.l.b16 %v44
    %v77 = vunpack.c.l.b16 %v45
    %v78 = vunpack.c.l.b16 %v46
    %v79 = vpack.c.b16 %v64, %v63
    %v80 = vpack.c.b16 %v66, %v65
    %v81 = vpack.c.b16 %v68, %v67
    %v82 = vpack.c.b16 %v70, %v69
    %v83 = vpack.c.b16 %v72, %v71
    %v84 = vpack.c.b16 %v74, %v73
    %v85 = vpack.c.b16 %v76, %v75
    %v86 = vpack.c.b16 %v78, %v77
    %95 = vmatprep.subr.bf16.mxu0 0
    %96 = vmatpush1.bf16.msra.mxu0 %v79
    %97 = vmatprep.subr.bf16.mxu0 0
    %98 = vmatpush1.bf16.msra.mxu0 %v80
    %99 = vmatprep.subr.bf16.mxu0 0
    %100 = vmatpush1.bf16.msra.mxu0 %v81
    %101 = vmatprep.subr.bf16.mxu0 0
    %102 = vmatpush1.bf16.msra.mxu0 %v82
    %103 = vmatprep.subr.bf16.mxu0 0
    %104 = vmatpush1.bf16.msra.mxu0 %v83
    %105 = vmatprep.subr.bf16.mxu0 0
    %106 = vmatpush1.bf16.msra.mxu0 %v84
    %107 = vmatprep.subr.bf16.mxu0 0
    %108 = vmatpush1.bf16.msra.mxu0 %v85
    %109 = vmatprep.subr.bf16.mxu0 0
    %110 = vmatpush1.bf16.msra.mxu0 %v86
    %111 = vmatprep.subr.bf16.mxu0 0
    %112 = vmatpush1.bf16.msra.mxu0 0
    %113 = vmatprep.subr.bf16.mxu0 0
    %114 = vmatpush1.bf16.msra.mxu0 0
    %115 = vmatprep.subr.bf16.mxu0 0
    %116 = vmatpush1.bf16.msra.mxu0 0
    %117 = vmatprep.subr.bf16.mxu0 0
    %118 = vmatpush1.bf16.msra.mxu0 0
    %119 = vmatprep.subr.bf16.mxu0 0
    %120 = vmatpush1.bf16.msra.mxu0 0
    %121 = vmatprep.subr.bf16.mxu0 0
    %122 = vmatpush1.bf16.msra.mxu0 0
    %123 = vmatprep.subr.bf16.mxu0 0
    %124 = vmatpush1.bf16.msra.mxu0 0
    %125 = vmatprep.subr.bf16.mxu0 0
    %126 = vmatpush1.bf16.msra.mxu0 0
    %127 = vmatprep.mubr.bf16.mxu0 0
    %128 = vmatmul.mubr.bf16.gmra.mrb[0].mxu0 %v30
    %v129 = vpop.f32.mrb[0].mxu0
    %v130 = vadd.f32 0.0, %v129
    %v131 = vpop.f32.mrb[0].mxu0
    %v132 = vpop.f32.mrb[0].mxu0
    %v133 = vpop.f32.mrb[0].mxu0
    %134 = vdwg.mxu0
    %v135 = vld [vmem:[%s4] sm:$0x1]
    %v136 = vld [vmem:[%s4 + $0x1] sm:$0x1]
    %v137 = vld [vmem:[%s4 + $0x2] sm:$0x1]
    %v138 = vld [vmem:[%s4 + $0x8] sm:$0xff]
    %v139 = vmul.f32 %v130, %v130
    %vm140 = vcmask 261120
    %v141 = vsel %vm140, %v139, 0.0
    %142 = vadd.xlane.f32.xlu0 %v141
    %v143 = vpop.xlane.xlu0 %142
    %v144 = vrcp.pop 32.0
    %v145 = vmul.f32 %v143, %v144
    %v146 = vadd.f32 %v145, 1e-05
    %v147 = vrsqrt.pop %v146
    %v148 = vmul.f32 %v130, %v147
    %v149 = vlaneseq
    %v150 = vshrl.u32 %v149, 7
    %v151 = vsub.s32 0, %v150
    %v152 = vrot.slane %v135, %v151
    %v153 = vmul.f32 %v148, %v152
    %v154 = vpack.c.bf16 %v153, %v153
    %v155 = vld [vmem:[%s2 + $0x8] sm:$0xf]
    %v156 = vld [vmem:[%s2 + $0x14] sm:$0xf]
    %v157 = vld [vmem:[%s2 + $0x20] sm:$0xf]
    %v158 = vld [vmem:[%s2 + $0x2c] sm:$0xf]
    %v163 = vunpack.c.l.b16 %v155
    %v164 = vunpack.c.l.b16 %v156
    %v165 = vunpack.c.l.b16 %v157
    %v166 = vunpack.c.l.b16 %v158
    %v167 = vpack.c.b16 %v164, %v163
    %v168 = vpack.c.b16 %v166, %v165
    %v172 = vsel %vm140, %v154, 0
    %174 = vmatprep.subr.bf16.mxu0 0
    %175 = vmatpush1.bf16.msra.mxu0 %v167
    %176 = vmatprep.subr.bf16.mxu0 0
    %177 = vmatpush1.bf16.msra.mxu0 %v168
    %178 = vmatprep.subr.bf16.mxu0 0
    %179 = vmatpush1.bf16.msra.mxu0 0
    %180 = vmatprep.subr.bf16.mxu0 0
    %181 = vmatpush1.bf16.msra.mxu0 0
    %182 = vmatprep.subr.bf16.mxu0 0
    %183 = vmatpush1.bf16.msra.mxu0 0
    %184 = vmatprep.subr.bf16.mxu0 0
    %185 = vmatpush1.bf16.msra.mxu0 0
    %186 = vmatprep.subr.bf16.mxu0 0
    %187 = vmatpush1.bf16.msra.mxu0 0
    %188 = vmatprep.subr.bf16.mxu0 0
    %189 = vmatpush1.bf16.msra.mxu0 0
    %190 = vmatprep.subr.bf16.mxu0 0
    %191 = vmatpush1.bf16.msra.mxu0 0
    %192 = vmatprep.subr.bf16.mxu0 0
    %193 = vmatpush1.bf16.msra.mxu0 0
    %194 = vmatprep.subr.bf16.mxu0 0
    %195 = vmatpush1.bf16.msra.mxu0 0
    %196 = vmatprep.subr.bf16.mxu0 0
    %197 = vmatpush1.bf16.msra.mxu0 0
    %198 = vmatprep.subr.bf16.mxu0 0
    %199 = vmatpush1.bf16.msra.mxu0 0
    %200 = vmatprep.subr.bf16.mxu0 0
    %201 = vmatpush1.bf16.msra.mxu0 0
    %202 = vmatprep.subr.bf16.mxu0 0
    %203 = vmatpush1.bf16.msra.mxu0 0
    %204 = vmatprep.subr.bf16.mxu0 0
    %205 = vmatpush1.bf16.msra.mxu0 0
    %206 = vmatprep.mubr.bf16.mxu0 0
    %207 = vmatmul.mubr.bf16.gmra.mrb[0].mxu0 %v172
    %v208 = vpop.f32.mrb[0].mxu0
    %v209 = vadd.f32 0.0, %v208
    %v210 = vpop.f32.mrb[0].mxu0
    %v211 = vpop.f32.mrb[0].mxu0
    %v212 = vpop.f32.mrb[0].mxu0
    %213 = vdwg.mxu0
    %v214 = vsub.f32 0.0, %v209
    %216 = vrot.lane.b32.xlu0 %v214, 88
    %v217 = vpop.permute.xlu0 %216
    %220 = vrot.lane.b32.xlu0 %v209, 104
    %v221 = vpop.permute.xlu0 %220
    %vm223 = vcmask 64512
    %v224 = vsel %vm223, %v217, %v221
    %226 = vrot.lane.b32.xlu0 %v138, 32
    %v227 = vpop.permute.xlu0 %226
    %v229 = vmul.f32 %v209, %v227
    %230 = vrot.lane.b32.xlu0 %v138, 112
    %v231 = vpop.permute.xlu0 %230
    %v233 = vmul.f32 %v224, %v231
    %235 = vrot.lane.b32.xlu0 %v233, 32
    %v236 = vpop.permute.xlu0 %235
    %v238 = vadd.f32 %v229, %v236
    %240 = vrot.lane.b32.xlu0 %v238, 96
    %v241 = vpop.permute.xlu0 %240
    %243 = vxpose.xlu0.b32.start [1/16] %v241, 128
    %244 = vxpose.xlu0.b32.cont [2/16] 0.0, 128
    %245 = vxpose.xlu0.b32.cont [3/16] 0.0, 128
    %246 = vxpose.xlu0.b32.cont [4/16] 0.0, 128
    %247 = vxpose.xlu0.b32.cont [5/16] 0.0, 128
    %248 = vxpose.xlu0.b32.cont [6/16] 0.0, 128
    %249 = vxpose.xlu0.b32.cont [7/16] 0.0, 128
    %250 = vxpose.xlu0.b32.cont [8/16] 0.0, 128
    %251 = vxpose.xlu0.b32.cont [9/16] 0.0, 128
    %252 = vxpose.xlu0.b32.cont [10/16] 0.0, 128
    %253 = vxpose.xlu0.b32.cont [11/16] 0.0, 128
    %254 = vxpose.xlu0.b32.cont [12/16] 0.0, 128
    %255 = vxpose.xlu0.b32.cont [13/16] 0.0, 128
    %256 = vxpose.xlu0.b32.cont [14/16] 0.0, 128
    %257 = vxpose.xlu0.b32.cont [15/16] 0.0, 128
    %258 = vxpose.xlu0.b32.end [16/16] 0.0, 128
    %v259 = vpop.trf.xlu0
    %v260 = vpop.trf.xlu0
    %v261 = vpop.trf.xlu0
    %v262 = vpop.trf.xlu0
    %v263 = vpop.trf.xlu0
    %v264 = vpop.trf.xlu0
    %v265 = vpop.trf.xlu0
    %v266 = vpop.trf.xlu0
    %v267 = vpop.trf.xlu0
    %v268 = vpop.trf.xlu0
    %v269 = vpop.trf.xlu0
    %v270 = vpop.trf.xlu0
    %v271 = vpop.trf.xlu0
    %v272 = vpop.trf.xlu0
    %v273 = vpop.trf.xlu0
    %v274 = vpop.trf.xlu0
    %v275 = vpack.c.bf16 %v260, %v259
    %v276 = vpack.c.bf16 %v209, %v209
    %v277 = vlaneseq
    %v278 = vshrl.u32 %v277, 7
    %vm279 = vcmp.le.s32.totalorder %v24, %v278
    %280 = vrot.lane.b32.xlu0 %v214, 120
    %v281 = vpop.permute.xlu0 %280
    %283 = vrot.lane.b32.xlu0 %v209, 8
    %v284 = vpop.permute.xlu0 %283
    %v286 = vsel %vm223, %v281, %v284
    %v287 = vmul.f32 %v209, %v138
    %v288 = vmul.f32 %v286, %v231
    %v289 = vadd.f32 %v287, %v288
    %v290 = vmul.f32 %v289, 0.25
    %v291 = vpack.c.bf16 %v290, %v290
    %vm292 = vcmask 130048
    %v294 = vsel %vm292, %v291, 0
    %296 = vmatprep.subr.bf16.mxu0 0
    %297 = vmatpush1.bf16.msra.mxu0 %v275
    %298 = vmatprep.subr.bf16.mxu0 0
    %299 = vmatpush1.bf16.msra.mxu0 0
    %300 = vmatprep.subr.bf16.mxu0 0
    %301 = vmatpush1.bf16.msra.mxu0 0
    %302 = vmatprep.subr.bf16.mxu0 0
    %303 = vmatpush1.bf16.msra.mxu0 0
    %304 = vmatprep.subr.bf16.mxu0 0
    %305 = vmatpush1.bf16.msra.mxu0 0
    %306 = vmatprep.subr.bf16.mxu0 0
    %307 = vmatpush1.bf16.msra.mxu0 0
    %308 = vmatprep.subr.bf16.mxu0 0
    %309 = vmatpush1.bf16.msra.mxu0 0
    %310 = vmatprep.subr.bf16.mxu0 0
    %311 = vmatpush1.bf16.msra.mxu0 0
    %312 = vmatprep.subr.bf16.mxu0 0
    %313 = vmatpush1.bf16.msra.mxu0 0
    %314 = vmatprep.subr.bf16.mxu0 0
    %315 = vmatpush1.bf16.msra.mxu0 0
    %316 = vmatprep.subr.bf16.mxu0 0
    %317 = vmatpush1.bf16.msra.mxu0 0
    %318 = vmatprep.subr.bf16.mxu0 0
    %319 = vmatpush1.bf16.msra.mxu0 0
    %320 = vmatprep.subr.bf16.mxu0 0
    %321 = vmatpush1.bf16.msra.mxu0 0
    %322 = vmatprep.subr.bf16.mxu0 0
    %323 = vmatpush1.bf16.msra.mxu0 0
    %324 = vmatprep.subr.bf16.mxu0 0
    %325 = vmatpush1.bf16.msra.mxu0 0
    %326 = vmatprep.subr.bf16.mxu0 0
    %327 = vmatpush1.bf16.msra.mxu0 0
    %328 = vmatprep.mubr.bf16.mxu0 0
    %329 = vmatmul.mubr.bf16.gmra.mrb[0].mxu0 %v294
    %v330 = vpop.f32.mrb[0].mxu0
    %v331 = vadd.f32 0.0, %v330
    %v332 = vpop.f32.mrb[0].mxu0
    %v333 = vpop.f32.mrb[0].mxu0
    %v334 = vpop.f32.mrb[0].mxu0
    %335 = vdwg.mxu0
    %v336 = vsel %vm279, %v331, -1e+30
    %v337 = vsel %vm223, %v336, -inf
    %338 = vmax.xlane.f32.xlu0 %v337
    %v339 = vpop.xlane.xlu0 %338
    %v340 = vsub.f32 %v336, %v339
    %v341 = vmul.f32 %v340, 1.442695
    %v342 = vpow.pop %v341
    %v343 = vsel %vm223, %v342, 0.0
    %344 = vadd.xlane.f32.xlu0 %v343
    %v345 = vpop.xlane.xlu0 %344
    %v346 = vpack.c.bf16 %v342, %v342
    %348 = vrot.lane.b32.xlu0 %v276, 80
    %v349 = vpop.permute.xlu0 %348
    %v351 = vsel %vm223, %v346, 0
    %vm353 = vcmask 1043456
    %v355 = vsel %vm353, %v349, 0
    %357 = vmatprep.subr.bf16.mxu0 0
    %358 = vmatpush1.bf16.msra.mxu0 %v355
    %359 = vmatprep.subr.bf16.mxu0 0
    %360 = vmatpush1.bf16.msra.mxu0 0
    %361 = vmatprep.subr.bf16.mxu0 0
    %362 = vmatpush1.bf16.msra.mxu0 0
    %363 = vmatprep.subr.bf16.mxu0 0
    %364 = vmatpush1.bf16.msra.mxu0 0
    %365 = vmatprep.subr.bf16.mxu0 0
    %366 = vmatpush1.bf16.msra.mxu0 0
    %367 = vmatprep.subr.bf16.mxu0 0
    %368 = vmatpush1.bf16.msra.mxu0 0
    %369 = vmatprep.subr.bf16.mxu0 0
    %370 = vmatpush1.bf16.msra.mxu0 0
    %371 = vmatprep.subr.bf16.mxu0 0
    %372 = vmatpush1.bf16.msra.mxu0 0
    %373 = vmatprep.subr.bf16.mxu0 0
    %374 = vmatpush1.bf16.msra.mxu0 0
    %375 = vmatprep.subr.bf16.mxu0 0
    %376 = vmatpush1.bf16.msra.mxu0 0
    %377 = vmatprep.subr.bf16.mxu0 0
    %378 = vmatpush1.bf16.msra.mxu0 0
    %379 = vmatprep.subr.bf16.mxu0 0
    %380 = vmatpush1.bf16.msra.mxu0 0
    %381 = vmatprep.subr.bf16.mxu0 0
    %382 = vmatpush1.bf16.msra.mxu0 0
    %383 = vmatprep.subr.bf16.mxu0 0
    %384 = vmatpush1.bf16.msra.mxu0 0
    %385 = vmatprep.subr.bf16.mxu0 0
    %386 = vmatpush1.bf16.msra.mxu0 0
    %387 = vmatprep.subr.bf16.mxu0 0
    %388 = vmatpush1.bf16.msra.mxu0 0
    %389 = vmatprep.mubr.bf16.mxu0 0
    %390 = vmatmul.mubr.bf16.gmra.mrb[0].mxu0 %v351
    %v391 = vpop.f32.mrb[0].mxu0
    %v392 = vadd.f32 0.0, %v391
    %v393 = vpop.f32.mrb[0].mxu0
    %v394 = vpop.f32.mrb[0].mxu0
    %v395 = vpop.f32.mrb[0].mxu0
    %396 = vdwg.mxu0
    %v397 = vrcp.pop %v345
    %v398 = vmul.f32 %v392, %v397
    %v399 = vld [vmem:[%s3] sm:$0xf]
    %v400 = vld [vmem:[%s3 + $0x4] sm:$0xf]
    %v401 = vpack.c.bf16 %v398, %v398
    %v404 = vunpack.c.l.b16 %v399
    %v405 = vunpack.c.l.b16 %v400
    %v406 = vpack.c.b16 %v405, %v404
    %v409 = vsel %vm292, %v401, 0
    %411 = vmatprep.subr.bf16.mxu0 0
    %412 = vmatpush1.bf16.msra.mxu0 %v406
    %413 = vmatprep.subr.bf16.mxu0 0
    %414 = vmatpush1.bf16.msra.mxu0 0
    %415 = vmatprep.subr.bf16.mxu0 0
    %416 = vmatpush1.bf16.msra.mxu0 0
    %417 = vmatprep.subr.bf16.mxu0 0
    %418 = vmatpush1.bf16.msra.mxu0 0
    %419 = vmatprep.subr.bf16.mxu0 0
    %420 = vmatpush1.bf16.msra.mxu0 0
    %421 = vmatprep.subr.bf16.mxu0 0
    %422 = vmatpush1.bf16.msra.mxu0 0
    %423 = vmatprep.subr.bf16.mxu0 0
    %424 = vmatpush1.bf16.msra.mxu0 0
    %425 = vmatprep.subr.bf16.mxu0 0
    %426 = vmatpush1.bf16.msra.mxu0 0
    %427 = vmatprep.subr.bf16.mxu0 0
    %428 = vmatpush1.bf16.msra.mxu0 0
    %429 = vmatprep.subr.bf16.mxu0 0
    %430 = vmatpush1.bf16.msra.mxu0 0
    %431 = vmatprep.subr.bf16.mxu0 0
    %432 = vmatpush1.bf16.msra.mxu0 0
    %433 = vmatprep.subr.bf16.mxu0 0
    %434 = vmatpush1.bf16.msra.mxu0 0
    %435 = vmatprep.subr.bf16.mxu0 0
    %436 = vmatpush1.bf16.msra.mxu0 0
    %437 = vmatprep.subr.bf16.mxu0 0
    %438 = vmatpush1.bf16.msra.mxu0 0
    %439 = vmatprep.subr.bf16.mxu0 0
    %440 = vmatpush1.bf16.msra.mxu0 0
    %441 = vmatprep.subr.bf16.mxu0 0
    %442 = vmatpush1.bf16.msra.mxu0 0
    %443 = vmatprep.mubr.bf16.mxu0 0
    %444 = vmatmul.mubr.bf16.gmra.mrb[0].mxu0 %v409
    %v445 = vpop.f32.mrb[0].mxu0
    %v446 = vadd.f32 0.0, %v445
    %v447 = vpop.f32.mrb[0].mxu0
    %v448 = vpop.f32.mrb[0].mxu0
    %v449 = vpop.f32.mrb[0].mxu0
    %450 = vdwg.mxu0
    %v451 = vadd.f32 %v130, %v446
    %452 = vrot.lane.b32.xlu0 %v214, 104
    %v453 = vpop.permute.xlu0 %452
    %455 = vrot.lane.b32.xlu0 %v209, 120
    %v456 = vpop.permute.xlu0 %455
    %v458 = vsel %vm223, %v453, %v456
    %459 = vrot.lane.b32.xlu0 %v138, 16
    %v460 = vpop.permute.xlu0 %459
    %v462 = vmul.f32 %v209, %v460
    %v463 = vmul.f32 %v458, %v231
    %465 = vrot.lane.b32.xlu0 %v463, 16
    %v466 = vpop.permute.xlu0 %465
    %v468 = vadd.f32 %v462, %v466
    %v469 = vmul.f32 %v468, 0.25
    %v470 = vpack.c.bf16 %v469, %v469
    %472 = vrot.lane.b32.xlu0 %v470, 112
    %v473 = vpop.permute.xlu0 %472
    %v475 = vsel %vm292, %v473, 0
    %477 = vmatprep.subr.bf16.mxu0 0
    %478 = vmatpush1.bf16.msra.mxu0 %v275
    %479 = vmatprep.subr.bf16.mxu0 0
    %480 = vmatpush1.bf16.msra.mxu0 0
    %481 = vmatprep.subr.bf16.mxu0 0
    %482 = vmatpush1.bf16.msra.mxu0 0
    %483 = vmatprep.subr.bf16.mxu0 0
    %484 = vmatpush1.bf16.msra.mxu0 0
    %485 = vmatprep.subr.bf16.mxu0 0
    %486 = vmatpush1.bf16.msra.mxu0 0
    %487 = vmatprep.subr.bf16.mxu0 0
    %488 = vmatpush1.bf16.msra.mxu0 0
    %489 = vmatprep.subr.bf16.mxu0 0
    %490 = vmatpush1.bf16.msra.mxu0 0
    %491 = vmatprep.subr.bf16.mxu0 0
    %492 = vmatpush1.bf16.msra.mxu0 0
    %493 = vmatprep.subr.bf16.mxu0 0
    %494 = vmatpush1.bf16.msra.mxu0 0
    %495 = vmatprep.subr.bf16.mxu0 0
    %496 = vmatpush1.bf16.msra.mxu0 0
    %497 = vmatprep.subr.bf16.mxu0 0
    %498 = vmatpush1.bf16.msra.mxu0 0
    %499 = vmatprep.subr.bf16.mxu0 0
    %500 = vmatpush1.bf16.msra.mxu0 0
    %501 = vmatprep.subr.bf16.mxu0 0
    %502 = vmatpush1.bf16.msra.mxu0 0
    %503 = vmatprep.subr.bf16.mxu0 0
    %504 = vmatpush1.bf16.msra.mxu0 0
    %505 = vmatprep.subr.bf16.mxu0 0
    %506 = vmatpush1.bf16.msra.mxu0 0
    %507 = vmatprep.subr.bf16.mxu0 0
    %508 = vmatpush1.bf16.msra.mxu0 0
    %509 = vmatprep.mubr.bf16.mxu0 0
    %510 = vmatmul.mubr.bf16.gmra.mrb[0].mxu0 %v475
    %v511 = vpop.f32.mrb[0].mxu0
    %v512 = vadd.f32 0.0, %v511
    %v513 = vpop.f32.mrb[0].mxu0
    %v514 = vpop.f32.mrb[0].mxu0
    %v515 = vpop.f32.mrb[0].mxu0
    %516 = vdwg.mxu0
    %v517 = vsel %vm279, %v512, -1e+30
    %v518 = vsel %vm223, %v517, -inf
    %519 = vmax.xlane.f32.xlu0 %v518
    %v520 = vpop.xlane.xlu0 %519
    %v521 = vsub.f32 %v517, %v520
    %v522 = vmul.f32 %v521, 1.442695
    %v523 = vpow.pop %v522
    %v524 = vsel %vm223, %v523, 0.0
    %525 = vadd.xlane.f32.xlu0 %v524
    %v526 = vpop.xlane.xlu0 %525
    %v527 = vpack.c.bf16 %v523, %v523
    %v529 = vsel %vm223, %v527, 0
    %531 = vmatprep.subr.bf16.mxu0 0
    %532 = vmatpush1.bf16.msra.mxu0 %v355
    %533 = vmatprep.subr.bf16.mxu0 0
    %534 = vmatpush1.bf16.msra.mxu0 0
    %535 = vmatprep.subr.bf16.mxu0 0
    %536 = vmatpush1.bf16.msra.mxu0 0
    %537 = vmatprep.subr.bf16.mxu0 0
    %538 = vmatpush1.bf16.msra.mxu0 0
    %539 = vmatprep.subr.bf16.mxu0 0
    %540 = vmatpush1.bf16.msra.mxu0 0
    %541 = vmatprep.subr.bf16.mxu0 0
    %542 = vmatpush1.bf16.msra.mxu0 0
    %543 = vmatprep.subr.bf16.mxu0 0
    %544 = vmatpush1.bf16.msra.mxu0 0
    %545 = vmatprep.subr.bf16.mxu0 0
    %546 = vmatpush1.bf16.msra.mxu0 0
    %547 = vmatprep.subr.bf16.mxu0 0
    %548 = vmatpush1.bf16.msra.mxu0 0
    %549 = vmatprep.subr.bf16.mxu0 0
    %550 = vmatpush1.bf16.msra.mxu0 0
    %551 = vmatprep.subr.bf16.mxu0 0
    %552 = vmatpush1.bf16.msra.mxu0 0
    %553 = vmatprep.subr.bf16.mxu0 0
    %554 = vmatpush1.bf16.msra.mxu0 0
    %555 = vmatprep.subr.bf16.mxu0 0
    %556 = vmatpush1.bf16.msra.mxu0 0
    %557 = vmatprep.subr.bf16.mxu0 0
    %558 = vmatpush1.bf16.msra.mxu0 0
    %559 = vmatprep.subr.bf16.mxu0 0
    %560 = vmatpush1.bf16.msra.mxu0 0
    %561 = vmatprep.subr.bf16.mxu0 0
    %562 = vmatpush1.bf16.msra.mxu0 0
    %563 = vmatprep.mubr.bf16.mxu0 0
    %564 = vmatmul.mubr.bf16.gmra.mrb[0].mxu0 %v529
    %v565 = vpop.f32.mrb[0].mxu0
    %v566 = vadd.f32 0.0, %v565
    %v567 = vpop.f32.mrb[0].mxu0
    %v568 = vpop.f32.mrb[0].mxu0
    %v569 = vpop.f32.mrb[0].mxu0
    %570 = vdwg.mxu0
    %v571 = vrcp.pop %v526
    %v572 = vmul.f32 %v566, %v571
    %v573 = vld [vmem:[%s3 + $0x8] sm:$0xf]
    %v574 = vld [vmem:[%s3 + $0xc] sm:$0xf]
    %v575 = vpack.c.bf16 %v572, %v572
    %v578 = vunpack.c.l.b16 %v573
    %v579 = vunpack.c.l.b16 %v574
    %v580 = vpack.c.b16 %v579, %v578
    %v583 = vsel %vm292, %v575, 0
    %585 = vmatprep.subr.bf16.mxu0 0
    %586 = vmatpush1.bf16.msra.mxu0 %v580
    %587 = vmatprep.subr.bf16.mxu0 0
    %588 = vmatpush1.bf16.msra.mxu0 0
    %589 = vmatprep.subr.bf16.mxu0 0
    %590 = vmatpush1.bf16.msra.mxu0 0
    %591 = vmatprep.subr.bf16.mxu0 0
    %592 = vmatpush1.bf16.msra.mxu0 0
    %593 = vmatprep.subr.bf16.mxu0 0
    %594 = vmatpush1.bf16.msra.mxu0 0
    %595 = vmatprep.subr.bf16.mxu0 0
    %596 = vmatpush1.bf16.msra.mxu0 0
    %597 = vmatprep.subr.bf16.mxu0 0
    %598 = vmatpush1.bf16.msra.mxu0 0
    %599 = vmatprep.subr.bf16.mxu0 0
    %600 = vmatpush1.bf16.msra.mxu0 0
    %601 = vmatprep.subr.bf16.mxu0 0
    %602 = vmatpush1.bf16.msra.mxu0 0
    %603 = vmatprep.subr.bf16.mxu0 0
    %604 = vmatpush1.bf16.msra.mxu0 0
    %605 = vmatprep.subr.bf16.mxu0 0
    %606 = vmatpush1.bf16.msra.mxu0 0
    %607 = vmatprep.subr.bf16.mxu0 0
    %608 = vmatpush1.bf16.msra.mxu0 0
    %609 = vmatprep.subr.bf16.mxu0 0
    %610 = vmatpush1.bf16.msra.mxu0 0
    %611 = vmatprep.subr.bf16.mxu0 0
    %612 = vmatpush1.bf16.msra.mxu0 0
    %613 = vmatprep.subr.bf16.mxu0 0
    %614 = vmatpush1.bf16.msra.mxu0 0
    %615 = vmatprep.subr.bf16.mxu0 0
    %616 = vmatpush1.bf16.msra.mxu0 0
    %617 = vmatprep.mubr.bf16.mxu0 0
    %618 = vmatmul.mubr.bf16.gmra.mrb[0].mxu0 %v583
    %v619 = vpop.f32.mrb[0].mxu0
    %v620 = vadd.f32 0.0, %v619
    %v621 = vpop.f32.mrb[0].mxu0
    %v622 = vpop.f32.mrb[0].mxu0
    %v623 = vpop.f32.mrb[0].mxu0
    %624 = vdwg.mxu0
    %v625 = vadd.f32 %v451, %v620
    %v626 = vmul.f32 %v625, %v625
    %v627 = vsel %vm140, %v626, 0.0
    %628 = vadd.xlane.f32.xlu0 %v627
    %v629 = vpop.xlane.xlu0 %628
    %v630 = vmul.f32 %v629, %v144
    %v631 = vadd.f32 %v630, 1e-05
    %v632 = vrsqrt.pop %v631
    %v633 = vmul.f32 %v625, %v632
    %v634 = vlaneseq
    %v635 = vshrl.u32 %v634, 7
    %v636 = vsub.s32 0, %v635
    %v637 = vrot.slane %v136, %v636
    %v638 = vmul.f32 %v633, %v637
    %v639 = vpack.c.bf16 %v638, %v638
    %v640 = vld [vmem:[%s2] sm:$0xf]
    %v641 = vld [vmem:[%s2 + $0xc] sm:$0xf]
    %v642 = vld [vmem:[%s2 + $0x18] sm:$0xf]
    %v643 = vld [vmem:[%s2 + $0x24] sm:$0xf]
    %v648 = vunpack.c.l.b16 %v640
    %v649 = vunpack.c.l.b16 %v641
    %v650 = vunpack.c.l.b16 %v642
    %v651 = vunpack.c.l.b16 %v643
    %v652 = vpack.c.b16 %v649, %v648
    %v653 = vpack.c.b16 %v651, %v650
    %v657 = vsel %vm140, %v639, 0
    %659 = vmatprep.subr.bf16.mxu0 0
    %660 = vmatpush1.bf16.msra.mxu0 %v652
    %661 = vmatprep.subr.bf16.mxu0 0
    %662 = vmatpush1.bf16.msra.mxu0 %v653
    %663 = vmatprep.subr.bf16.mxu0 0
    %664 = vmatpush1.bf16.msra.mxu0 0
    %665 = vmatprep.subr.bf16.mxu0 0
    %666 = vmatpush1.bf16.msra.mxu0 0
    %667 = vmatprep.subr.bf16.mxu0 0
    %668 = vmatpush1.bf16.msra.mxu0 0
    %669 = vmatprep.subr.bf16.mxu0 0
    %670 = vmatpush1.bf16.msra.mxu0 0
    %671 = vmatprep.subr.bf16.mxu0 0
    %672 = vmatpush1.bf16.msra.mxu0 0
    %673 = vmatprep.subr.bf16.mxu0 0
    %674 = vmatpush1.bf16.msra.mxu0 0
    %675 = vmatprep.subr.bf16.mxu0 0
    %676 = vmatpush1.bf16.msra.mxu0 0
    %677 = vmatprep.subr.bf16.mxu0 0
    %678 = vmatpush1.bf16.msra.mxu0 0
    %679 = vmatprep.subr.bf16.mxu0 0
    %680 = vmatpush1.bf16.msra.mxu0 0
    %681 = vmatprep.subr.bf16.mxu0 0
    %682 = vmatpush1.bf16.msra.mxu0 0
    %683 = vmatprep.subr.bf16.mxu0 0
    %684 = vmatpush1.bf16.msra.mxu0 0
    %685 = vmatprep.subr.bf16.mxu0 0
    %686 = vmatpush1.bf16.msra.mxu0 0
    %687 = vmatprep.subr.bf16.mxu0 0
    %688 = vmatpush1.bf16.msra.mxu0 0
    %689 = vmatprep.subr.bf16.mxu0 0
    %690 = vmatpush1.bf16.msra.mxu0 0
    %691 = vmatprep.mubr.bf16.mxu0 0
    %692 = vmatmul.mubr.bf16.gmra.mrb[0].mxu0 %v657
    %v693 = vpop.f32.mrb[0].mxu0
    %v694 = vadd.f32 0.0, %v693
    %v695 = vpop.f32.mrb[0].mxu0
    %v696 = vpop.f32.mrb[0].mxu0
    %v697 = vpop.f32.mrb[0].mxu0
    %698 = vdwg.mxu0
    %v699 = vxor.u32 %v694, 2147483648
    %v700 = vmul.f32 %v699, 1.442695
    %v701 = vpow.pop %v700
    %v702 = vadd.f32 %v701, 1.0
    %v703 = vrcp.pop %v702
    %v704 = vmul.f32 1.0, %v703
    %v705 = vmul.f32 %v694, %v704
    %707 = vrot.lane.b32.xlu0 %v694, 64
    %v708 = vpop.permute.xlu0 %707
    %v710 = vmul.f32 %v705, %v708
    %v711 = vpack.c.bf16 %v710, %v710
    %v712 = vld [vmem:[%s3 + $0x10] sm:$0xf]
    %v713 = vld [vmem:[%s3 + $0x14] sm:$0xf]
    %v714 = vld [vmem:[%s3 + $0x18] sm:$0xf]
    %v715 = vld [vmem:[%s3 + $0x1c] sm:$0xf]
    %v716 = vld [vmem:[%s3 + $0x20] sm:$0xf]
    %v717 = vld [vmem:[%s3 + $0x24] sm:$0xf]
    %v718 = vld [vmem:[%s3 + $0x28] sm:$0xf]
    %v719 = vld [vmem:[%s3 + $0x2c] sm:$0xf]
    %v728 = vunpack.c.l.b16 %v712
    %v729 = vunpack.c.l.b16 %v713
    %v730 = vunpack.c.l.b16 %v714
    %v731 = vunpack.c.l.b16 %v715
    %v732 = vunpack.c.l.b16 %v716
    %v733 = vunpack.c.l.b16 %v717
    %v734 = vunpack.c.l.b16 %v718
    %v735 = vunpack.c.l.b16 %v719
    %v736 = vpack.c.b16 %v729, %v728
    %v737 = vpack.c.b16 %v731, %v730
    %v738 = vpack.c.b16 %v733, %v732
    %v739 = vpack.c.b16 %v735, %v734
    %vm744 = vcmask 523264
    %v746 = vsel %vm744, %v711, 0
    %748 = vmatprep.subr.bf16.mxu0 0
    %749 = vmatpush1.bf16.msra.mxu0 %v736
    %750 = vmatprep.subr.bf16.mxu0 0
    %751 = vmatpush1.bf16.msra.mxu0 %v737
    %752 = vmatprep.subr.bf16.mxu0 0
    %753 = vmatpush1.bf16.msra.mxu0 %v738
    %754 = vmatprep.subr.bf16.mxu0 0
    %755 = vmatpush1.bf16.msra.mxu0 %v739
    %756 = vmatprep.subr.bf16.mxu0 0
    %757 = vmatpush1.bf16.msra.mxu0 0
    %758 = vmatprep.subr.bf16.mxu0 0
    %759 = vmatpush1.bf16.msra.mxu0 0
    %760 = vmatprep.subr.bf16.mxu0 0
    %761 = vmatpush1.bf16.msra.mxu0 0
    %762 = vmatprep.subr.bf16.mxu0 0
    %763 = vmatpush1.bf16.msra.mxu0 0
    %764 = vmatprep.subr.bf16.mxu0 0
    %765 = vmatpush1.bf16.msra.mxu0 0
    %766 = vmatprep.subr.bf16.mxu0 0
    %767 = vmatpush1.bf16.msra.mxu0 0
    %768 = vmatprep.subr.bf16.mxu0 0
    %769 = vmatpush1.bf16.msra.mxu0 0
    %770 = vmatprep.subr.bf16.mxu0 0
    %771 = vmatpush1.bf16.msra.mxu0 0
    %772 = vmatprep.subr.bf16.mxu0 0
    %773 = vmatpush1.bf16.msra.mxu0 0
    %774 = vmatprep.subr.bf16.mxu0 0
    %775 = vmatpush1.bf16.msra.mxu0 0
    %776 = vmatprep.subr.bf16.mxu0 0
    %777 = vmatpush1.bf16.msra.mxu0 0
    %778 = vmatprep.subr.bf16.mxu0 0
    %779 = vmatpush1.bf16.msra.mxu0 0
    %780 = vmatprep.mubr.bf16.mxu0 0
    %781 = vmatmul.mubr.bf16.gmra.mrb[0].mxu0 %v746
    %v782 = vpop.f32.mrb[0].mxu0
    %v783 = vadd.f32 0.0, %v782
    %v784 = vpop.f32.mrb[0].mxu0
    %v785 = vpop.f32.mrb[0].mxu0
    %v786 = vpop.f32.mrb[0].mxu0
    %787 = vdwg.mxu0
    %v788 = vadd.f32 %v625, %v783
    %v789 = vmul.f32 %v788, %v788
    %v790 = vsel %vm140, %v789, 0.0
    %791 = vadd.xlane.f32.xlu0 %v790
    %v792 = vpop.xlane.xlu0 %791
    %v793 = vmul.f32 %v792, %v144
    %v794 = vadd.f32 %v793, 1e-05
    %v795 = vrsqrt.pop %v794
    %v796 = vmul.f32 %v788, %v795
    %v797 = vlaneseq
    %v798 = vshrl.u32 %v797, 7
    %v799 = vsub.s32 0, %v798
    %v800 = vrot.slane %v137, %v799
    %v801 = vmul.f32 %v796, %v800
    %v802 = vpack.c.bf16 %v801, %v801
    %v803 = vld [vmem:[%s2 + $0x4] sm:$0xf]
    %v804 = vld [vmem:[%s2 + $0x10] sm:$0xf]
    %v805 = vld [vmem:[%s2 + $0x1c] sm:$0xf]
    %v806 = vld [vmem:[%s2 + $0x28] sm:$0xf]
    %v811 = vunpack.c.l.b16 %v803
    %v812 = vunpack.c.l.b16 %v804
    %v813 = vunpack.c.l.b16 %v805
    %v814 = vunpack.c.l.b16 %v806
    %v815 = vpack.c.b16 %v812, %v811
    %v816 = vpack.c.b16 %v814, %v813
    %v820 = vsel %vm140, %v802, 0
    %822 = vmatprep.subr.bf16.mxu0 0
    %823 = vmatpush1.bf16.msra.mxu0 %v815
    %824 = vmatprep.subr.bf16.mxu0 0
    %825 = vmatpush1.bf16.msra.mxu0 %v816
    %826 = vmatprep.subr.bf16.mxu0 0
    %827 = vmatpush1.bf16.msra.mxu0 0
    %828 = vmatprep.subr.bf16.mxu0 0
    %829 = vmatpush1.bf16.msra.mxu0 0
    %830 = vmatprep.subr.bf16.mxu0 0
    %831 = vmatpush1.bf16.msra.mxu0 0
    %832 = vmatprep.subr.bf16.mxu0 0
    %833 = vmatpush1.bf16.msra.mxu0 0
    %834 = vmatprep.subr.bf16.mxu0 0
    %835 = vmatpush1.bf16.msra.mxu0 0
    %836 = vmatprep.subr.bf16.mxu0 0
    %837 = vmatpush1.bf16.msra.mxu0 0
    %838 = vmatprep.subr.bf16.mxu0 0
    %839 = vmatpush1.bf16.msra.mxu0 0
    %840 = vmatprep.subr.bf16.mxu0 0
    %841 = vmatpush1.bf16.msra.mxu0 0
    %842 = vmatprep.subr.bf16.mxu0 0
    %843 = vmatpush1.bf16.msra.mxu0 0
    %844 = vmatprep.subr.bf16.mxu0 0
    %845 = vmatpush1.bf16.msra.mxu0 0
    %846 = vmatprep.subr.bf16.mxu0 0
    %847 = vmatpush1.bf16.msra.mxu0 0
    %848 = vmatprep.subr.bf16.mxu0 0
    %849 = vmatpush1.bf16.msra.mxu0 0
    %850 = vmatprep.subr.bf16.mxu0 0
    %851 = vmatpush1.bf16.msra.mxu0 0
    %852 = vmatprep.subr.bf16.mxu0 0
    %853 = vmatpush1.bf16.msra.mxu0 0
    %854 = vmatprep.mubr.bf16.mxu0 0
    %855 = vmatmul.mubr.bf16.gmra.mrb[0].mxu0 %v820
    %v856 = vpop.f32.mrb[0].mxu0
    %v857 = vadd.f32 0.0, %v856
    %v858 = vpop.f32.mrb[0].mxu0
    %v859 = vpop.f32.mrb[0].mxu0
    %v860 = vpop.f32.mrb[0].mxu0
    %861 = vdwg.mxu0
    %862 = vst [vmem:[#allocation2] sm:$0xff] %v857
    // Predicated region
    $region22: #{glm_forward.1} parent=1 // pred_check
      _
    $region23: #{glm_forward.1} parent=1 // pred_check_branch
      %864 = sbr.rel (0) target = $region25
    $region24: #{glm_forward.1} parent=1 // pred_region
      %s866 = ssub.s32 128, 128
      %867 = vsyncadd [#allocation3], %s866
      %s869 = sshll.u32 [#allocation2], 4
      %s870 = int_to_ptr.vmem [resolvable:$true] %s869
      %872 = dma.vmem_to_hbm [thread:$0]  %s870, 128, %s5, [#allocation3]
    $region25: #{glm_forward.1} parent=1 // pred_fallthru
      _
    // Predicated region
    $region26: #{glm_forward.1} parent=1 // pred_check
      _
    $region27: #{glm_forward.1} parent=1 // pred_check_branch
      %874 = sbr.rel (0) target = $region29
    $region28: #{glm_forward.1} parent=1 // pred_region
      %875 = dma.done [#allocation3], 128
    $region29: #{glm_forward.1} parent=1 // pred_fallthru
      _
    %876 = vsyncpa [#allocation3], 1

</llo_original>
